<compile_context>
chip_gen: v5e
topology: v5e:2x2
jax: 0.10.0
libtpu: 0.0.40
codegen_flags: <defaults>
</compile_context>

<pallas_src>
import functools

import jax
import jax.numpy as jnp
from jax import lax
from jax.experimental import pallas as pl
from jax.experimental.pallas import tpu as pltpu


def _focal_loss_kernel(logits_ref, targets_ref, out_ref, *, gamma, alpha,
                       n_valid, tile_n, needs_mask):
    """One batch tile: writes its partial focal-loss sum into a lane-dense block."""
    i = pl.program_id(0)

    x = logits_ref[...].astype(jnp.float32)          # (tile_n, C)
    t = targets_ref[...]                             # (tile_n, 1) int32
    tn, c = x.shape

    # Gather the target logit: select-then-reduce (cheaper than one-hot * x).
    cls = lax.broadcasted_iota(jnp.int32, (tn, c), 1)
    tgt_logit = jnp.sum(jnp.where(cls == t, x, 0.0), axis=-1, keepdims=True)

    # Numerically stable log-sum-exp -> per-sample cross entropy (reduction='none').
    m = jnp.max(x, axis=-1, keepdims=True)
    lse = m + jnp.log(jnp.sum(jnp.exp(x - m), axis=-1, keepdims=True))
    # Clamp: fp rounding could make (lse - tgt_logit) epsilon-negative, which
    # would make (1 - pt) negative and pow(neg, fractional gamma) = NaN.
    ce = jnp.maximum(lse - tgt_logit, 0.0)           # (tile_n, 1)

    pt = jnp.exp(-ce)
    base = 1.0 - pt
    if float(gamma).is_integer() and 0.0 <= gamma <= 16.0:
        # Integer gamma: multiply chain on the (idle) VPU instead of EUP pow;
        # gamma == 0 gives weight 1 without relying on pow(0, 0) behavior.
        w = jnp.ones_like(base)
        for _ in range(int(gamma)):
            w = w * base
    else:
        w = jnp.power(jnp.maximum(base, 0.0), gamma)
    focal = alpha * w * ce                           # (tile_n, 1)

    if needs_mask:
        # Ragged final tile: rows past the true batch size hold garbage VMEM
        # (LSE over them may be inf/NaN). A *select* blocks propagation; do
        # NOT replace with arithmetic masking (mul by 0 would keep NaN).
        row = lax.broadcasted_iota(jnp.int32, (tn, 1), 0) + i * tile_n
        focal = jnp.where(row < n_valid, focal, 0.0)

    # Per-tile partial sum, replicated across one lane-dense (8,128) block.
    partial = jnp.sum(focal)
    out_ref[...] = jnp.full(out_ref.shape, partial, jnp.float32)


def _vmem_budget():
    """(working budget for tiles+temps, scoped vmem_limit cap) per generation."""
    try:
        cap = int(pltpu.get_tpu_info().vmem_capacity_bytes)
    except Exception:
        cap = 64 * 1024 * 1024                       # conservative fallback
    if cap <= 64 * 1024 * 1024:                      # v7x-class (64 MiB physical)
        return 24 * 1024 * 1024, 28 * 1024 * 1024
    return 40 * 1024 * 1024, 48 * 1024 * 1024        # v5e / v6e (128 MiB)


def focal_loss(logits, targets, *, gamma=0.0, alpha=1.0, eps=1e-7,
               tile_n=None):
    """Pallas implementation of FocalLoss.forward. Returns a scalar."""
    del eps  # eps is declared in __init__ but unused in the reference forward.
    n, c = logits.shape
    targets2d = targets.astype(jnp.int32).reshape(n, 1)

    itemsize = jnp.dtype(logits.dtype).itemsize
    c_pad = ((c + 127) // 128) * 128                 # lane-padded row width
    n_pad8 = ((n + 7) // 8) * 8
    budget, scoped_cap = _vmem_budget()

    if tile_n is None:
        # Per-row VMEM cost: double-buffered logits (input dtype) + ~4 full-C
        # f32 in-kernel temporaries + double-buffered targets column.
        per_row = 2 * c_pad * itemsize + 4 * c_pad * 4 + 2 * 128 * 4
        tile_n = (budget // per_row) // 8 * 8
        tile_n = int(max(8, min(8192, tile_n)))
        tile_n = min(tile_n, n_pad8)
        if tile_n >= n_pad8:
            # Grid would collapse to one step: split in two so both v7x
            # TensorCores engage, but only if each half still moves >= 1 MiB.
            half = ((n_pad8 // 2 + 7) // 8) * 8
            if half >= 8 and half * c_pad * itemsize >= (1 << 20):
                tile_n = half
    else:
        tile_n = int(max(8, (int(tile_n) // 8) * 8))
        tile_n = min(tile_n, n_pad8)
    tile_n = int(tile_n)
    num_tiles = int(pl.cdiv(n, tile_n))
    needs_mask = (n % tile_n) != 0

    # Scoped-VMEM limit from the actual lane-padded tile footprint + headroom.
    est = (2 * tile_n * c_pad * itemsize             # logits double-buffer
           + 4 * tile_n * c_pad * 4                  # f32 temporaries
           + 2 * tile_n * 128 * 4                    # targets double-buffer
           + 2 * 8 * 128 * 4)                        # output block
    vmem_limit = int(min(scoped_cap, max(16 * 1024 * 1024, int(est * 1.25))))

    kernel = functools.partial(
        _focal_loss_kernel,
        gamma=float(gamma), alpha=float(alpha), n_valid=n, tile_n=tile_n,
        needs_mask=needs_mask)

    partials = pl.pallas_call(
        kernel,
        out_shape=jax.ShapeDtypeStruct((num_tiles, 8, 128), jnp.float32),
        grid_spec=pltpu.PrefetchScalarGridSpec(
            num_scalar_prefetch=0,
            grid=(num_tiles,),
            in_specs=[
                pl.BlockSpec((tile_n, c), lambda i: (i, 0)),   # logits tile (full C)
                pl.BlockSpec((tile_n, 1), lambda i: (i, 0)),   # targets tile
            ],
            out_specs=pl.BlockSpec((1, 8, 128), lambda i: (i, 0, 0)),
        ),
        compiler_params=pltpu.CompilerParams(
            dimension_semantics=("parallel",),       # independent batch tiles
            vmem_limit_bytes=vmem_limit),
    )(logits, targets2d)

    # Tiny epilogue in JAX: one replica of each per-tile partial sum, then the
    # mean over the true batch size (ref: .mean()).
    return jnp.sum(partials[:, 0, 0]) / jnp.float32(n)


def _focal_loss_ref(logits, targets, gamma, alpha):
    """Pure-JAX reference mirroring the PyTorch forward exactly."""
    logp = jax.nn.log_softmax(logits.astype(jnp.float32), axis=-1)
    ce = -jnp.take_along_axis(logp, targets[:, None].astype(jnp.int32), axis=-1)[:, 0]
    pt = jnp.exp(-ce)
    return jnp.mean(alpha * (1.0 - pt) ** gamma * ce)


if __name__ == "__main__":
    key = jax.random.PRNGKey(0)
    k_logits, k_targets = jax.random.split(key)

    # Case 1: module defaults-ish shapes, integer gamma (fast multiply path).
    N, C = 16, 32
    GAMMA, ALPHA = 2.0, 0.25
    logits = jax.random.normal(k_logits, (N, C), dtype=jnp.float32)
    targets = jax.random.randint(k_targets, (N,), 0, C, dtype=jnp.int32)
    loss = jax.block_until_ready(focal_loss(logits, targets, gamma=GAMMA, alpha=ALPHA))
    ref = _focal_loss_ref(logits, targets, GAMMA, ALPHA)
    assert jnp.allclose(loss, ref, rtol=1e-5, atol=1e-6), (loss, ref)

    # Case 2: ragged batch (N not a multiple of tile_n) + default gamma=0.
    N2 = 13
    logits2 = jax.random.normal(k_logits, (N2, C), dtype=jnp.float32)
    targets2 = jax.random.randint(k_targets, (N2,), 0, C, dtype=jnp.int32)
    loss2 = jax.block_until_ready(focal_loss(logits2, targets2, tile_n=8))
    ref2 = _focal_loss_ref(logits2, targets2, 0.0, 1.0)
    assert jnp.allclose(loss2, ref2, rtol=1e-5, atol=1e-6), (loss2, ref2)

    # Case 3: fractional gamma (pow path, ce clamp guards the NaN hazard).
    loss3 = jax.block_until_ready(focal_loss(logits, targets, gamma=1.5, alpha=0.5))
    ref3 = _focal_loss_ref(logits, targets, 1.5, 0.5)
    assert jnp.allclose(loss3, ref3, rtol=1e-5, atol=1e-6), (loss3, ref3)

    print("KERNEL_OK")
</pallas_src>

<mosaic_0001>
module attributes {stable_mosaic.version = 11 : i64} {
  func.func @_focal_loss_kernel(%arg0: i32, %arg1: memref<16x32xf32, #tpu.memory_space<vmem>>, %arg2: memref<16x1xi32, #tpu.memory_space<vmem>>, %arg3: memref<1x8x128xf32, #tpu.memory_space<vmem>>) attributes {dimension_semantics = [#tpu.dimension_semantics<parallel>], iteration_bounds = array<i64: 1>, scalar_prefetch = 0 : i64, scratch_operands = 0 : i64, tpu.core_type = #tpu.core_type<tc>, window_params = [{transform_indices = @transform_0, window_bounds = array<i64: 16, 32>}, {transform_indices = @transform_1, window_bounds = array<i64: 16, 1>}, {transform_indices = @transform_2, window_bounds = array<i64: 1, 8, 128>}]} {
    %c0 = arith.constant 0 : index
    %c0_0 = arith.constant 0 : index
    %0 = vector.load %arg1[%c0, %c0_0] : memref<16x32xf32, #tpu.memory_space<vmem>>, vector<16x32xf32>
    %c0_1 = arith.constant 0 : index
    %c0_2 = arith.constant 0 : index
    %1 = vector.load %arg2[%c0_1, %c0_2] : memref<16x1xi32, #tpu.memory_space<vmem>>, vector<16x1xi32>
    %2 = tpu.iota {dimensions = array<i32: 1>} : vector<16x32xi32>
    %3 = vector.broadcast %1 : vector<16x1xi32> to vector<16x32xi32>
    %4 = arith.cmpi eq, %2, %3 : vector<16x32xi32>
    %cst = arith.constant 0.000000e+00 : f32
    %5 = vector.broadcast %cst : f32 to vector<16x32xf32>
    %6 = arith.select %4, %0, %5 : vector<16x32xi1>, vector<16x32xf32>
    %cst_3 = arith.constant dense<0.000000e+00> : vector<16xf32>
    %7 = vector.multi_reduction <add>, %6, %cst_3 [1] : vector<16x32xf32> to vector<16xf32>
    %8 = vector.shape_cast %7 : vector<16xf32> to vector<16x1xf32>
    %cst_4 = arith.constant dense<0xFF800000> : vector<16xf32>
    %9 = vector.multi_reduction <maximumf>, %0, %cst_4 [1] : vector<16x32xf32> to vector<16xf32>
    %10 = vector.shape_cast %9 : vector<16xf32> to vector<16x1xf32>
    %11 = vector.broadcast %10 : vector<16x1xf32> to vector<16x32xf32>
    %12 = arith.subf %0, %11 : vector<16x32xf32>
    %13 = math.exp %12 : vector<16x32xf32>
    %cst_5 = arith.constant dense<0.000000e+00> : vector<16xf32>
    %14 = vector.multi_reduction <add>, %13, %cst_5 [1] : vector<16x32xf32> to vector<16xf32>
    %15 = vector.shape_cast %14 : vector<16xf32> to vector<16x1xf32>
    %16 = math.log %15 : vector<16x1xf32>
    %17 = arith.addf %10, %16 : vector<16x1xf32>
    %18 = arith.subf %17, %8 : vector<16x1xf32>
    %cst_6 = arith.constant 0.000000e+00 : f32
    %19 = vector.broadcast %cst_6 : f32 to vector<16x1xf32>
    %20 = arith.maximumf %18, %19 : vector<16x1xf32>
    %cst_7 = arith.constant 0.000000e+00 : f32
    %21 = vector.broadcast %cst_7 : f32 to vector<16x1xf32>
    %22 = arith.subf %21, %20 : vector<16x1xf32>
    %23 = math.exp %22 : vector<16x1xf32>
    %cst_8 = arith.constant 1.000000e+00 : f32
    %24 = vector.broadcast %cst_8 : f32 to vector<16x1xf32>
    %25 = arith.subf %24, %23 : vector<16x1xf32>
    %cst_9 = arith.constant 1.000000e+00 : f32
    %26 = vector.broadcast %cst_9 : f32 to vector<16x1xf32>
    %27 = arith.mulf %26, %25 : vector<16x1xf32>
    %28 = arith.mulf %27, %25 : vector<16x1xf32>
    %cst_10 = arith.constant 2.500000e-01 : f32
    %29 = vector.broadcast %cst_10 : f32 to vector<16x1xf32>
    %30 = arith.mulf %29, %28 : vector<16x1xf32>
    %31 = arith.mulf %30, %20 : vector<16x1xf32>
    %32 = vector.shape_cast %31 : vector<16x1xf32> to vector<1x16x1xf32>
    %cst_11 = arith.constant dense<0.000000e+00> : vector<1xf32>
    %33 = vector.multi_reduction <add>, %32, %cst_11 [1, 2] : vector<1x16x1xf32> to vector<1xf32>
    %34 = vector.shape_cast %33 : vector<1xf32> to vector<1x1x1xf32>
    %35 = vector.extract %34[0, 0, 0] : f32 from vector<1x1x1xf32>
    %36 = vector.broadcast %35 : f32 to vector<1x8x128xf32>
    %c0_12 = arith.constant 0 : index
    %c0_13 = arith.constant 0 : index
    %c0_14 = arith.constant 0 : index
    %37 = vector.load %arg3[%c0_12, %c0_13, %c0_14] : memref<1x8x128xf32, #tpu.memory_space<vmem>>, vector<1x8x128xf32>
    tpu.vector_store %arg3[%c0_12, %c0_13, %c0_14], %36 {strides = array<i32>} : memref<1x8x128xf32, #tpu.memory_space<vmem>>, vector<1x8x128xf32>,
    return
  }
  func.func @transform_0(%arg0: i32) -> (i32, i32) {
    %c0_i32 = arith.constant 0 : i32
    %c0_i32_0 = arith.constant 0 : i32
    return %arg0, %c0_i32 : i32, i32
  }
  func.func @transform_1(%arg0: i32) -> (i32, i32) {
    %c0_i32 = arith.constant 0 : i32
    %c0_i32_0 = arith.constant 0 : i32
    return %arg0, %c0_i32 : i32, i32
  }
  func.func @transform_2(%arg0: i32) -> (i32, i32, i32) {
    %c0_i32 = arith.constant 0 : i32
    %c0_i32_0 = arith.constant 0 : i32
    %c0_i32_1 = arith.constant 0 : i32
    return %arg0, %c0_i32, %c0_i32_0 : i32, i32, i32
  }
}

</mosaic_0001>

<llo_original>
// kernel: tpu_custom_call.1
$region0: #{tpu_custom_call.1}
  #allocation0 [shape = 'u32[]', space=smem, size = 0x4, offset = 0x4, fixed_abs, tag = 'smem constant byte address 0x4 - core index']
  #allocation1 [shape = 'u32[72,128]{1,0:T(1,128)}', space=vmem, size = 0x9000, scoped, tag = 'internal scratch']
  %s0 = inlined_call_operand.vmem [shape: f32[16,32], index: 0, kind: input, shape index: {}]
  %s1 = inlined_call_operand.vmem [shape: s32[16,1], index: 1, kind: input, shape index: {}]
  %s2 = inlined_call_operand.hbm [shape: f32[1,8,128], index: 2, kind: output, shape index: {}]
  %s3 = sld [smem:[#allocation0]]
  $region18: #{tpu_custom_call.1} parent=0
    _
  %s5 = ssub.s32 1, %s3
  %s6 = scalar_select 0, %s5, %s3
  $region1: #{tpu_custom_call.1} parent=0
    #allocation2 [shape = 'u8[4096]{0}', space=vmem, size = 0x1000, scoped, tag = 'output window, operand 0, single buffered']
    #allocation3 [shape = 's32[1]{0}', space=sflag, size = 0x4, scoped, tag = 'scoped memory for tpu_custom_call.1']
    %7 = vsyncpa [#allocation3], 0
    // Predicated region
    $region2: #{tpu_custom_call.1} parent=1 // pred_check
      _
    $region3: #{tpu_custom_call.1} parent=1 // pred_check_branch
      %9 = sbr.rel (0) target = $region5
    $region4: #{tpu_custom_call.1} parent=1 // pred_region
      _
    $region5: #{tpu_custom_call.1} parent=1 // pred_fallthru
      _
    // Predicated region
    $region6: #{tpu_custom_call.1} parent=1 // pred_check
      _
    $region7: #{tpu_custom_call.1} parent=1 // pred_check_branch
      %11 = sbr.rel (0) target = $region9
    $region8: #{tpu_custom_call.1} parent=1 // pred_region
      _
    $region9: #{tpu_custom_call.1} parent=1 // pred_fallthru
      _
    %v12 = vld [vmem:[%s0] sm:$0xff]
    %v13 = vld [vmem:[%s0 + $0x8] sm:$0xff]
    %v14 = vld [vmem:[%s1] sm:$0xff]
    %v15 = vld [vmem:[%s1 + $0x8] sm:$0xff]
    %v16 = vlaneseq
    %v17 = vand.u32 %v16, 127
    %18 = vset.pattern.permute.xlu0 0
    %19 = vperm.xlu0 %18, %v14
    %v20 = vpop.permute.xlu0 %19
    %21 = vset.pattern.permute.xlu0 0
    %22 = vperm.xlu0 %21, %v15
    %v23 = vpop.permute.xlu0 %22
    %vm24 = vcmp.eq.s32.totalorder %v17, %v20
    %vm25 = vcmp.eq.s32.totalorder %v17, %v23
    %v26 = vsel %vm24, %v12, 0.0
    %v27 = vsel %vm25, %v13, 0.0
    %vm28 = vcmask 261120
    %v29 = vsel %vm28, %v26, 0.0
    %30 = vadd.xlane.f32.xlu0 %v29
    %v31 = vpop.xlane.xlu0 %30
    %v32 = vsel %vm28, %v27, 0.0
    %33 = vadd.xlane.f32.xlu0 %v32
    %v34 = vpop.xlane.xlu0 %33
    %v35 = vsel %vm28, %v12, -inf
    %36 = vmax.xlane.f32.xlu0 %v35
    %v37 = vpop.xlane.xlu0 %36
    %v38 = vsel %vm28, %v13, -inf
    %39 = vmax.xlane.f32.xlu0 %v38
    %v40 = vpop.xlane.xlu0 %39
    %v41 = vsub.f32 %v12, %v37
    %v42 = vsub.f32 %v13, %v40
    %v43 = vmul.f32 %v41, 1.442695
    %v44 = vpow.pop %v43
    %v45 = vmul.f32 %v42, 1.442695
    %v46 = vpow.pop %v45
    %v47 = vsel %vm28, %v44, 0.0
    %48 = vadd.xlane.f32.xlu0 %v47
    %v49 = vpop.xlane.xlu0 %48
    %v50 = vsel %vm28, %v46, 0.0
    %51 = vadd.xlane.f32.xlu0 %v50
    %v52 = vpop.xlane.xlu0 %51
    %v53 = vlog2.pop %v49
    %v54 = vmul.f32 %v53, 0.6931472
    %v55 = vlog2.pop %v52
    %v56 = vmul.f32 %v55, 0.6931472
    %v57 = vadd.f32 %v37, %v54
    %v58 = vadd.f32 %v40, %v56
    %v59 = vsub.f32 %v57, %v31
    %v60 = vsub.f32 %v58, %v34
    %v61 = vmax.f32 %v59, 0.0
    %v62 = vmax.f32 %v60, 0.0
    %v63 = vsub.f32 0.0, %v61
    %v64 = vsub.f32 0.0, %v62
    %v65 = vmul.f32 %v63, 1.442695
    %v66 = vpow.pop %v65
    %v67 = vmul.f32 %v64, 1.442695
    %v68 = vpow.pop %v67
    %v69 = vsub.f32 1.0, %v66
    %v70 = vsub.f32 1.0, %v68
    %v71 = vmul.f32 %v69, %v69
    %v72 = vmul.f32 %v70, %v70
    %v73 = vmul.f32 %v71, 0.25
    %v74 = vmul.f32 %v72, 0.25
    %v75 = vmul.f32 %v73, %v61
    %v76 = vmul.f32 %v74, %v62
    %vm77 = vcmask 7168
    %v78 = vsel %vm77, %v75, 0.0
    %v79 = vsel %vm77, %v76, 0.0
    %v80 = vadd.f32 %v78, %v79
    %81 = vadd.xlane.f32.xlu0 %v80
    %v82 = vpop.xlane.xlu0 %81
    %v83 = vrot.slane %v82, 4
    %v84 = vadd.f32 %v82, %v83
    %v85 = vrot.slane %v84, 2
    %v86 = vadd.f32 %v84, %v85
    %v87 = vrot.slane %v86, 1
    %v88 = vadd.f32 %v86, %v87
    %s89 = vtos %v88
    %v90 = vstv %s89
    %91 = vst [vmem:[#allocation2] sm:$0xff] %v90
    // Predicated region
    $region10: #{tpu_custom_call.1} parent=1 // pred_check
      _
    $region11: #{tpu_custom_call.1} parent=1 // pred_check_branch
      %93 = sbr.rel (0) target = $region13
    $region12: #{tpu_custom_call.1} parent=1 // pred_region
      %95 = vsyncadd [#allocation3], 0
      %s97 = sshll.u32 [#allocation2], 4
      %s98 = int_to_ptr.vmem [resolvable:$true] %s97
      %s99 = sshll.u32 %s2, 4
      %s100 = int_to_ptr.hbm [resolvable:$true] %s99
      %102 = dma.vmem_to_hbm [thread:$0]  %s98, 128, %s100, [#allocation3]
    $region13: #{tpu_custom_call.1} parent=1 // pred_fallthru
      _
    // Predicated region
    $region14: #{tpu_custom_call.1} parent=1 // pred_check
      _
    $region15: #{tpu_custom_call.1} parent=1 // pred_check_branch
      %104 = sbr.rel (0) target = $region17
    $region16: #{tpu_custom_call.1} parent=1 // pred_region
      %106 = dma.done [#allocation3], 128
    $region17: #{tpu_custom_call.1} parent=1 // pred_fallthru
      _
    %107 = vsyncpa [#allocation3], 1

</llo_original>
